<compile_context>
chip_gen: v7x
topology: tpu7x:2x2x1
jax: 0.10.0
libtpu: 0.0.40
codegen_flags: <defaults>
</compile_context>

<pallas_src>
import jax
import jax.numpy as jnp
from jax.experimental import pallas as pl
from jax.experimental.pallas import tpu as pltpu

LN_EPS = 1e-5

# feature segments of the fused 48-wide output
SEG_O, SEG_V, SEG_H = 28, 18, 2
OUT_F = SEG_O + SEG_V + SEG_H            # 48
O_IN, V_IN, H_IN = 14, 9, 1
IN_F = O_IN + V_IN + H_IN                # 24

# packed weight slab row offsets (8-aligned starts -> no sublane relayouts)
W1O_R, W1V_R, W1H_R, W2_R = 0, 16, 32, 40
W_ROWS = W2_R + OUT_F                    # 88

TB_CAP = 4096                            # batch-tile cap (~25 MiB VMEM, see header)


def _round_up(n, m):
    return ((n + m - 1) // m) * m


def walker_encoder_kernel(o_ref, v_ref, h_ref, w_ref, p_ref, out_ref):
    o = o_ref[...]                                  # (TB, 14)
    vel = v_ref[...]                                # (TB, 9)
    hgt = h_ref[...]                                # (TB, 1)

    w1_o = w_ref[W1O_R:W1O_R + O_IN, :]             # (14, 48) cols [0,28) live
    w1_v = w_ref[W1V_R:W1V_R + V_IN, :]             # (9, 48)  cols [28,46) live
    w1_h = w_ref[W1H_R:W1H_R + H_IN, :]             # (1, 48)  cols [46,48) live
    w2 = w_ref[W2_R:W2_R + OUT_F, :]                # (48, 48) block-diagonal

    b1, b2 = p_ref[0:1, :], p_ref[1:2, :]
    gamma, beta = p_ref[2:3, :], p_ref[3:4, :]

    # fused Linear -> ReLU -> Linear; column-block weights keep segments independent
    h = (jnp.dot(o, w1_o, preferred_element_type=jnp.float32)
         + jnp.dot(vel, w1_v, preferred_element_type=jnp.float32)
         + hgt * w1_h                               # fan-in 1: VPU broadcast mul
         + b1)
    h = jnp.maximum(h, 0.0)
    y = jnp.dot(h, w2, preferred_element_type=jnp.float32) + b2    # (TB, 48)

    # segmented LayerNorm: (1,48) lane masks broadcast over the batch
    lane = jax.lax.broadcasted_iota(jnp.int32, (1, OUT_F), 1)
    m_o = lane < SEG_O
    m_v = jnp.logical_and(lane >= SEG_O, lane < SEG_O + SEG_V)
    m_h = lane >= SEG_O + SEG_V

    def seg_mean(vals, mask, inv_n):
        return jnp.sum(jnp.where(mask, vals, 0.0), axis=-1, keepdims=True) * inv_n

    mu_o = seg_mean(y, m_o, 1.0 / SEG_O)
    mu_v = seg_mean(y, m_v, 1.0 / SEG_V)
    mu_h = seg_mean(y, m_h, 1.0 / SEG_H)
    mu = jnp.where(m_o, mu_o, jnp.where(m_v, mu_v, mu_h))          # (TB, 48)

    d = y - mu
    d2 = d * d
    # rsqrt only on the three (TB,1) per-segment variances (EUP is a single unit)
    r_o = jax.lax.rsqrt(seg_mean(d2, m_o, 1.0 / SEG_O) + LN_EPS)
    r_v = jax.lax.rsqrt(seg_mean(d2, m_v, 1.0 / SEG_V) + LN_EPS)
    r_h = jax.lax.rsqrt(seg_mean(d2, m_h, 1.0 / SEG_H) + LN_EPS)
    inv_std = jnp.where(m_o, r_o, jnp.where(m_v, r_v, r_h))        # (TB, 48)

    out_ref[...] = d * inv_std * gamma + beta       # one lane-dense f32 store


def init_params(key):
    """Deterministic synthetic parameters (shapes match the PyTorch module)."""
    def linear(k, fan_in, fan_out):
        kw, kb = jax.random.split(k)
        bound = 1.0 / jnp.sqrt(float(fan_in))
        w = jax.random.uniform(kw, (fan_in, fan_out), jnp.float32, -bound, bound)
        b = jax.random.uniform(kb, (1, fan_out), jnp.float32, -bound, bound)
        return w, b

    keys = jax.random.split(key, 6)
    params = {}
    params["ow1"], params["ob1"] = linear(keys[0], 14, 28)
    params["ow2"], params["ob2"] = linear(keys[1], 28, 28)
    params["og"] = jnp.ones((1, 28), jnp.float32)
    params["obt"] = jnp.zeros((1, 28), jnp.float32)
    params["vw1"], params["vb1"] = linear(keys[2], 9, 18)
    params["vw2"], params["vb2"] = linear(keys[3], 18, 18)
    params["vg"] = jnp.ones((1, 18), jnp.float32)
    params["vbt"] = jnp.zeros((1, 18), jnp.float32)
    params["hw1"], params["hb1"] = linear(keys[4], 1, 2)
    params["hw2"], params["hb2"] = linear(keys[5], 2, 2)
    params["hg"] = jnp.ones((1, 2), jnp.float32)
    params["hbt"] = jnp.zeros((1, 2), jnp.float32)
    return params


def pack_params(params):
    """Two packed parameter slabs (built once in the wrapper, tiny)."""
    w = jnp.zeros((W_ROWS, OUT_F), jnp.float32)
    # first layer: column-block weights (rows 8-aligned per segment)
    w = w.at[W1O_R:W1O_R + O_IN, 0:SEG_O].set(params["ow1"])
    w = w.at[W1V_R:W1V_R + V_IN, SEG_O:SEG_O + SEG_V].set(params["vw1"])
    w = w.at[W1H_R:W1H_R + H_IN, SEG_O + SEG_V:OUT_F].set(params["hw1"])
    # second layer: block-diagonal (48, 48)
    w = w.at[W2_R:W2_R + SEG_O, 0:SEG_O].set(params["ow2"])
    w = w.at[W2_R + SEG_O:W2_R + SEG_O + SEG_V, SEG_O:SEG_O + SEG_V].set(params["vw2"])
    w = w.at[W2_R + SEG_O + SEG_V:W2_R + OUT_F, SEG_O + SEG_V:OUT_F].set(params["hw2"])

    def row(a, b, c):
        return jnp.concatenate([a, b, c], axis=-1)                  # (1, 48)

    p = jnp.concatenate([
        row(params["ob1"], params["vb1"], params["hb1"]),
        row(params["ob2"], params["vb2"], params["hb2"]),
        row(params["og"], params["vg"], params["hg"]),
        row(params["obt"], params["vbt"], params["hbt"]),
    ], axis=0)                                                      # (4, 48)
    return w, p


def walker_encoder(x: dict, params: dict) -> jnp.ndarray:
    orientations = jnp.asarray(x["orientations"], jnp.float32)
    velocity = jnp.asarray(x["velocity"], jnp.float32)
    height = jnp.asarray(x["height"], jnp.float32)
    if height.ndim == 1:
        height = height[:, None]                                    # height.unsqueeze(-1)
    B = orientations.shape[0]

    w_packed, p_packed = pack_params(params)

    # pad the batch to a multiple of 8 only when needed (sublane alignment)
    bp = _round_up(B, 8)
    if bp != B:
        pad = ((0, bp - B), (0, 0))
        orientations = jnp.pad(orientations, pad)
        velocity = jnp.pad(velocity, pad)
        height = jnp.pad(height, pad)

    # batch tile: ~bp/2 (>=2 parallel grid steps whenever bp > 8, so both v7x
    # TensorCores get work), capped so the padded-lane VMEM footprint stays
    # ~25 MiB; ragged last blocks are handled by the cdiv grid (masked stores).
    tb = min(TB_CAP, _round_up((bp + 1) // 2, 8))
    grid_n = (bp + tb - 1) // tb

    param_bytes = (W_ROWS + 4) * OUT_F * 4
    cost = pl.CostEstimate(
        flops=2 * bp * (IN_F + OUT_F) * OUT_F,
        transcendentals=3 * bp,
        bytes_accessed=bp * (IN_F + OUT_F) * 4 + param_bytes,
    )

    out = pl.pallas_call(
        walker_encoder_kernel,
        out_shape=jax.ShapeDtypeStruct((bp, OUT_F), jnp.float32),
        grid=(grid_n,),
        in_specs=[
            pl.BlockSpec((tb, O_IN), lambda i: (i, 0)),
            pl.BlockSpec((tb, V_IN), lambda i: (i, 0)),
            pl.BlockSpec((tb, H_IN), lambda i: (i, 0)),
            pl.BlockSpec((W_ROWS, OUT_F), lambda i: (0, 0)),    # resident params
            pl.BlockSpec((4, OUT_F), lambda i: (0, 0)),
        ],
        out_specs=pl.BlockSpec((tb, OUT_F), lambda i: (i, 0)),
        compiler_params=pltpu.CompilerParams(
            dimension_semantics=("parallel",),
            vmem_limit_bytes=48 * 1024 * 1024,
        ),
        cost_estimate=cost,
    )(orientations, velocity, height, w_packed, p_packed)

    return out[:B]


def _mlp_ln_ref(x, w1, b1, w2, b2, gamma, beta):
    h = jnp.maximum(jnp.dot(x, w1, preferred_element_type=jnp.float32) + b1, 0.0)
    y = jnp.dot(h, w2, preferred_element_type=jnp.float32) + b2
    mu = jnp.mean(y, axis=-1, keepdims=True)
    var = jnp.mean((y - mu) * (y - mu), axis=-1, keepdims=True)
    return (y - mu) * jax.lax.rsqrt(var + LN_EPS) * gamma + beta


def walker_encoder_ref(x: dict, params: dict) -> jnp.ndarray:
    """Pure-JAX reference (mirrors the PyTorch module exactly)."""
    orientations = jnp.asarray(x["orientations"], jnp.float32)
    velocity = jnp.asarray(x["velocity"], jnp.float32)
    height = jnp.asarray(x["height"], jnp.float32)
    if height.ndim == 1:
        height = height[:, None]
    p = params
    o = _mlp_ln_ref(orientations, p["ow1"], p["ob1"], p["ow2"], p["ob2"], p["og"], p["obt"])
    v = _mlp_ln_ref(velocity, p["vw1"], p["vb1"], p["vw2"], p["vb2"], p["vg"], p["vbt"])
    h = _mlp_ln_ref(height, p["hw1"], p["hb1"], p["hw2"], p["hb2"], p["hg"], p["hbt"])
    return jnp.concatenate([o, v, h], axis=-1)


if __name__ == "__main__":
    key = jax.random.PRNGKey(0)
    k_par, k_ori, k_vel, k_hgt = jax.random.split(key, 4)

    params = init_params(k_par)

    def check(B, k_o, k_v, k_h):
        x = {
            "orientations": jax.random.normal(k_o, (B, 14), jnp.float32),
            "velocity": jax.random.normal(k_v, (B, 9), jnp.float32),
            "height": jax.random.normal(k_h, (B,), jnp.float32),   # 1-D -> unsqueeze path
        }
        out = jax.block_until_ready(walker_encoder(x, params))
        ref = jax.block_until_ready(walker_encoder_ref(x, params))
        assert out.shape == (B, 48), out.shape
        assert jnp.allclose(out, ref, atol=1e-5, rtol=1e-5), f"mismatch vs reference (B={B})"

    check(8, k_ori, k_vel, k_hgt)     # exact single tile
    check(5, k_ori, k_vel, k_hgt)     # ragged batch -> pad-to-8 path
    check(24, k_ori, k_vel, k_hgt)    # 2-step grid with partial last block

    print("KERNEL_OK")
</pallas_src>

<mosaic_0001>
module attributes {stable_mosaic.version = 11 : i64} {
  func.func @walker_encoder_kernel(%arg0: i32, %arg1: memref<8x14xf32, #tpu.memory_space<vmem>>, %arg2: memref<8x9xf32, #tpu.memory_space<vmem>>, %arg3: memref<8x1xf32, #tpu.memory_space<vmem>>, %arg4: memref<88x48xf32, #tpu.memory_space<vmem>>, %arg5: memref<4x48xf32, #tpu.memory_space<vmem>>, %arg6: memref<8x48xf32, #tpu.memory_space<vmem>>) attributes {dimension_semantics = [#tpu.dimension_semantics<parallel>], iteration_bounds = array<i64: 1>, scalar_prefetch = 0 : i64, scratch_operands = 0 : i64, tpu.core_type = #tpu.core_type<tc>, window_params = [{transform_indices = @transform_0, window_bounds = array<i64: 8, 14>}, {transform_indices = @transform_1, window_bounds = array<i64: 8, 9>}, {transform_indices = @transform_2, window_bounds = array<i64: 8, 1>}, {pipeline_mode = #tpu.pipeline_mode<synchronous>, transform_indices = @transform_3, window_bounds = array<i64: 88, 48>}, {pipeline_mode = #tpu.pipeline_mode<synchronous>, transform_indices = @transform_4, window_bounds = array<i64: 4, 48>}, {transform_indices = @transform_5, window_bounds = array<i64: 8, 48>}]} {
    %c0 = arith.constant 0 : index
    %c0_0 = arith.constant 0 : index
    %0 = vector.load %arg1[%c0, %c0_0] : memref<8x14xf32, #tpu.memory_space<vmem>>, vector<8x14xf32>
    %c0_1 = arith.constant 0 : index
    %c0_2 = arith.constant 0 : index
    %1 = vector.load %arg2[%c0_1, %c0_2] : memref<8x9xf32, #tpu.memory_space<vmem>>, vector<8x9xf32>
    %c0_3 = arith.constant 0 : index
    %c0_4 = arith.constant 0 : index
    %2 = vector.load %arg3[%c0_3, %c0_4] : memref<8x1xf32, #tpu.memory_space<vmem>>, vector<8x1xf32>
    %c0_5 = arith.constant 0 : index
    %c0_6 = arith.constant 0 : index
    %3 = vector.load %arg4[%c0_5, %c0_6] : memref<88x48xf32, #tpu.memory_space<vmem>>, vector<14x48xf32>
    %c16 = arith.constant 16 : index
    %c0_7 = arith.constant 0 : index
    %4 = vector.load %arg4[%c16, %c0_7] : memref<88x48xf32, #tpu.memory_space<vmem>>, vector<9x48xf32>
    %c32 = arith.constant 32 : index
    %c0_8 = arith.constant 0 : index
    %5 = vector.load %arg4[%c32, %c0_8] : memref<88x48xf32, #tpu.memory_space<vmem>>, vector<1x48xf32>
    %c40 = arith.constant 40 : index
    %c0_9 = arith.constant 0 : index
    %6 = vector.load %arg4[%c40, %c0_9] : memref<88x48xf32, #tpu.memory_space<vmem>>, vector<48x48xf32>
    %c0_10 = arith.constant 0 : index
    %c0_11 = arith.constant 0 : index
    %7 = vector.load %arg5[%c0_10, %c0_11] : memref<4x48xf32, #tpu.memory_space<vmem>>, vector<1x48xf32>
    %c1 = arith.constant 1 : index
    %c0_12 = arith.constant 0 : index
    %8 = vector.load %arg5[%c1, %c0_12] : memref<4x48xf32, #tpu.memory_space<vmem>>, vector<1x48xf32>
    %c2 = arith.constant 2 : index
    %c0_13 = arith.constant 0 : index
    %9 = vector.load %arg5[%c2, %c0_13] : memref<4x48xf32, #tpu.memory_space<vmem>>, vector<1x48xf32>
    %c3 = arith.constant 3 : index
    %c0_14 = arith.constant 0 : index
    %10 = vector.load %arg5[%c3, %c0_14] : memref<4x48xf32, #tpu.memory_space<vmem>>, vector<1x48xf32>
    %cst = arith.constant dense<0.000000e+00> : vector<8x48xf32>
    %11 = tpu.matmul %0, %3, %cst {dimension_numbers = #tpu.dot_dimension_numbers<[1], [0], [0], [1], [0, 0, 1, 1], [], []>} : vector<8x14xf32>, vector<14x48xf32>, vector<8x48xf32> -> vector<8x48xf32>
    %cst_15 = arith.constant dense<0.000000e+00> : vector<8x48xf32>
    %12 = tpu.matmul %1, %4, %cst_15 {dimension_numbers = #tpu.dot_dimension_numbers<[1], [0], [0], [1], [0, 0, 1, 1], [], []>} : vector<8x9xf32>, vector<9x48xf32>, vector<8x48xf32> -> vector<8x48xf32>
    %13 = arith.addf %11, %12 : vector<8x48xf32>
    %14 = vector.broadcast %2 : vector<8x1xf32> to vector<8x48xf32>
    %15 = vector.broadcast %5 : vector<1x48xf32> to vector<8x48xf32>
    %16 = arith.mulf %14, %15 : vector<8x48xf32>
    %17 = arith.addf %13, %16 : vector<8x48xf32>
    %18 = vector.broadcast %7 : vector<1x48xf32> to vector<8x48xf32>
    %19 = arith.addf %17, %18 : vector<8x48xf32>
    %cst_16 = arith.constant 0.000000e+00 : f32
    %20 = vector.broadcast %cst_16 : f32 to vector<8x48xf32>
    %21 = arith.maximumf %19, %20 : vector<8x48xf32>
    %cst_17 = arith.constant dense<0.000000e+00> : vector<8x48xf32>
    %22 = tpu.matmul %21, %6, %cst_17 {dimension_numbers = #tpu.dot_dimension_numbers<[1], [0], [0], [1], [0, 0, 1, 1], [], []>} : vector<8x48xf32>, vector<48x48xf32>, vector<8x48xf32> -> vector<8x48xf32>
    %23 = vector.broadcast %8 : vector<1x48xf32> to vector<8x48xf32>
    %24 = arith.addf %22, %23 : vector<8x48xf32>
    %25 = tpu.iota {dimensions = array<i32: 1>} : vector<1x48xi32>
    %c28_i32 = arith.constant 28 : i32
    %26 = vector.broadcast %c28_i32 : i32 to vector<1x48xi32>
    %27 = arith.cmpi slt, %25, %26 : vector<1x48xi32>
    %c28_i32_18 = arith.constant 28 : i32
    %28 = vector.broadcast %c28_i32_18 : i32 to vector<1x48xi32>
    %29 = arith.cmpi sge, %25, %28 : vector<1x48xi32>
    %c46_i32 = arith.constant 46 : i32
    %30 = vector.broadcast %c46_i32 : i32 to vector<1x48xi32>
    %31 = arith.cmpi slt, %25, %30 : vector<1x48xi32>
    %32 = arith.andi %29, %31 : vector<1x48xi1>
    %c46_i32_19 = arith.constant 46 : i32
    %33 = vector.broadcast %c46_i32_19 : i32 to vector<1x48xi32>
    %34 = arith.cmpi sge, %25, %33 : vector<1x48xi32>
    %cst_20 = arith.constant 0.000000e+00 : f32
    %35 = vector.shape_cast %27 : vector<1x48xi1> to vector<1x48xi1>
    %36 = vector.broadcast %35 : vector<1x48xi1> to vector<8x48xi1>
    %37 = vector.broadcast %cst_20 : f32 to vector<8x48xf32>
    %38 = arith.select %36, %24, %37 : vector<8x48xi1>, vector<8x48xf32>
    %cst_21 = arith.constant dense<0.000000e+00> : vector<8xf32>
    %39 = vector.multi_reduction <add>, %38, %cst_21 [1] : vector<8x48xf32> to vector<8xf32>
    %40 = vector.shape_cast %39 : vector<8xf32> to vector<8x1xf32>
    %cst_22 = arith.constant 0.0357142873 : f32
    %41 = vector.broadcast %cst_22 : f32 to vector<8x1xf32>
    %42 = arith.mulf %40, %41 : vector<8x1xf32>
    %cst_23 = arith.constant 0.000000e+00 : f32
    %43 = vector.shape_cast %32 : vector<1x48xi1> to vector<1x48xi1>
    %44 = vector.broadcast %43 : vector<1x48xi1> to vector<8x48xi1>
    %45 = vector.broadcast %cst_23 : f32 to vector<8x48xf32>
    %46 = arith.select %44, %24, %45 : vector<8x48xi1>, vector<8x48xf32>
    %cst_24 = arith.constant dense<0.000000e+00> : vector<8xf32>
    %47 = vector.multi_reduction <add>, %46, %cst_24 [1] : vector<8x48xf32> to vector<8xf32>
    %48 = vector.shape_cast %47 : vector<8xf32> to vector<8x1xf32>
    %cst_25 = arith.constant 0.055555556 : f32
    %49 = vector.broadcast %cst_25 : f32 to vector<8x1xf32>
    %50 = arith.mulf %48, %49 : vector<8x1xf32>
    %cst_26 = arith.constant 0.000000e+00 : f32
    %51 = vector.shape_cast %34 : vector<1x48xi1> to vector<1x48xi1>
    %52 = vector.broadcast %51 : vector<1x48xi1> to vector<8x48xi1>
    %53 = vector.broadcast %cst_26 : f32 to vector<8x48xf32>
    %54 = arith.select %52, %24, %53 : vector<8x48xi1>, vector<8x48xf32>
    %cst_27 = arith.constant dense<0.000000e+00> : vector<8xf32>
    %55 = vector.multi_reduction <add>, %54, %cst_27 [1] : vector<8x48xf32> to vector<8xf32>
    %56 = vector.shape_cast %55 : vector<8xf32> to vector<8x1xf32>
    %cst_28 = arith.constant 5.000000e-01 : f32
    %57 = vector.broadcast %cst_28 : f32 to vector<8x1xf32>
    %58 = arith.mulf %56, %57 : vector<8x1xf32>
    %59 = vector.shape_cast %32 : vector<1x48xi1> to vector<1x48xi1>
    %60 = vector.broadcast %59 : vector<1x48xi1> to vector<8x48xi1>
    %61 = vector.shape_cast %50 : vector<8x1xf32> to vector<8x1xf32>
    %62 = vector.broadcast %61 : vector<8x1xf32> to vector<8x48xf32>
    %63 = vector.shape_cast %58 : vector<8x1xf32> to vector<8x1xf32>
    %64 = vector.broadcast %63 : vector<8x1xf32> to vector<8x48xf32>
    %65 = arith.select %60, %62, %64 : vector<8x48xi1>, vector<8x48xf32>
    %66 = vector.shape_cast %27 : vector<1x48xi1> to vector<1x48xi1>
    %67 = vector.broadcast %66 : vector<1x48xi1> to vector<8x48xi1>
    %68 = vector.shape_cast %42 : vector<8x1xf32> to vector<8x1xf32>
    %69 = vector.broadcast %68 : vector<8x1xf32> to vector<8x48xf32>
    %70 = arith.select %67, %69, %65 : vector<8x48xi1>, vector<8x48xf32>
    %71 = arith.subf %24, %70 : vector<8x48xf32>
    %72 = arith.mulf %71, %71 : vector<8x48xf32>
    %cst_29 = arith.constant 0.000000e+00 : f32
    %73 = vector.shape_cast %27 : vector<1x48xi1> to vector<1x48xi1>
    %74 = vector.broadcast %73 : vector<1x48xi1> to vector<8x48xi1>
    %75 = vector.broadcast %cst_29 : f32 to vector<8x48xf32>
    %76 = arith.select %74, %72, %75 : vector<8x48xi1>, vector<8x48xf32>
    %cst_30 = arith.constant dense<0.000000e+00> : vector<8xf32>
    %77 = vector.multi_reduction <add>, %76, %cst_30 [1] : vector<8x48xf32> to vector<8xf32>
    %78 = vector.shape_cast %77 : vector<8xf32> to vector<8x1xf32>
    %cst_31 = arith.constant 0.0357142873 : f32
    %79 = vector.broadcast %cst_31 : f32 to vector<8x1xf32>
    %80 = arith.mulf %78, %79 : vector<8x1xf32>
    %cst_32 = arith.constant 9.99999974E-6 : f32
    %81 = vector.broadcast %cst_32 : f32 to vector<8x1xf32>
    %82 = arith.addf %80, %81 : vector<8x1xf32>
    %83 = math.rsqrt %82 : vector<8x1xf32>
    %cst_33 = arith.constant 0.000000e+00 : f32
    %84 = vector.shape_cast %32 : vector<1x48xi1> to vector<1x48xi1>
    %85 = vector.broadcast %84 : vector<1x48xi1> to vector<8x48xi1>
    %86 = vector.broadcast %cst_33 : f32 to vector<8x48xf32>
    %87 = arith.select %85, %72, %86 : vector<8x48xi1>, vector<8x48xf32>
    %cst_34 = arith.constant dense<0.000000e+00> : vector<8xf32>
    %88 = vector.multi_reduction <add>, %87, %cst_34 [1] : vector<8x48xf32> to vector<8xf32>
    %89 = vector.shape_cast %88 : vector<8xf32> to vector<8x1xf32>
    %cst_35 = arith.constant 0.055555556 : f32
    %90 = vector.broadcast %cst_35 : f32 to vector<8x1xf32>
    %91 = arith.mulf %89, %90 : vector<8x1xf32>
    %cst_36 = arith.constant 9.99999974E-6 : f32
    %92 = vector.broadcast %cst_36 : f32 to vector<8x1xf32>
    %93 = arith.addf %91, %92 : vector<8x1xf32>
    %94 = math.rsqrt %93 : vector<8x1xf32>
    %cst_37 = arith.constant 0.000000e+00 : f32
    %95 = vector.shape_cast %34 : vector<1x48xi1> to vector<1x48xi1>
    %96 = vector.broadcast %95 : vector<1x48xi1> to vector<8x48xi1>
    %97 = vector.broadcast %cst_37 : f32 to vector<8x48xf32>
    %98 = arith.select %96, %72, %97 : vector<8x48xi1>, vector<8x48xf32>
    %cst_38 = arith.constant dense<0.000000e+00> : vector<8xf32>
    %99 = vector.multi_reduction <add>, %98, %cst_38 [1] : vector<8x48xf32> to vector<8xf32>
    %100 = vector.shape_cast %99 : vector<8xf32> to vector<8x1xf32>
    %cst_39 = arith.constant 5.000000e-01 : f32
    %101 = vector.broadcast %cst_39 : f32 to vector<8x1xf32>
    %102 = arith.mulf %100, %101 : vector<8x1xf32>
    %cst_40 = arith.constant 9.99999974E-6 : f32
    %103 = vector.broadcast %cst_40 : f32 to vector<8x1xf32>
    %104 = arith.addf %102, %103 : vector<8x1xf32>
    %105 = math.rsqrt %104 : vector<8x1xf32>
    %106 = vector.shape_cast %32 : vector<1x48xi1> to vector<1x48xi1>
    %107 = vector.broadcast %106 : vector<1x48xi1> to vector<8x48xi1>
    %108 = vector.shape_cast %94 : vector<8x1xf32> to vector<8x1xf32>
    %109 = vector.broadcast %108 : vector<8x1xf32> to vector<8x48xf32>
    %110 = vector.shape_cast %105 : vector<8x1xf32> to vector<8x1xf32>
    %111 = vector.broadcast %110 : vector<8x1xf32> to vector<8x48xf32>
    %112 = arith.select %107, %109, %111 : vector<8x48xi1>, vector<8x48xf32>
    %113 = vector.shape_cast %27 : vector<1x48xi1> to vector<1x48xi1>
    %114 = vector.broadcast %113 : vector<1x48xi1> to vector<8x48xi1>
    %115 = vector.shape_cast %83 : vector<8x1xf32> to vector<8x1xf32>
    %116 = vector.broadcast %115 : vector<8x1xf32> to vector<8x48xf32>
    %117 = arith.select %114, %116, %112 : vector<8x48xi1>, vector<8x48xf32>
    %118 = arith.mulf %71, %117 : vector<8x48xf32>
    %119 = vector.broadcast %9 : vector<1x48xf32> to vector<8x48xf32>
    %120 = arith.mulf %118, %119 : vector<8x48xf32>
    %121 = vector.broadcast %10 : vector<1x48xf32> to vector<8x48xf32>
    %122 = arith.addf %120, %121 : vector<8x48xf32>
    %c0_41 = arith.constant 0 : index
    %c0_42 = arith.constant 0 : index
    %123 = vector.load %arg6[%c0_41, %c0_42] : memref<8x48xf32, #tpu.memory_space<vmem>>, vector<8x48xf32>
    tpu.vector_store %arg6[%c0_41, %c0_42], %122 {strides = array<i32>} : memref<8x48xf32, #tpu.memory_space<vmem>>, vector<8x48xf32>,
    return
  }
  func.func @transform_0(%arg0: i32) -> (i32, i32) {
    %c0_i32 = arith.constant 0 : i32
    %c0_i32_0 = arith.constant 0 : i32
    return %arg0, %c0_i32 : i32, i32
  }
  func.func @transform_1(%arg0: i32) -> (i32, i32) {
    %c0_i32 = arith.constant 0 : i32
    %c0_i32_0 = arith.constant 0 : i32
    return %arg0, %c0_i32 : i32, i32
  }
  func.func @transform_2(%arg0: i32) -> (i32, i32) {
    %c0_i32 = arith.constant 0 : i32
    %c0_i32_0 = arith.constant 0 : i32
    return %arg0, %c0_i32 : i32, i32
  }
  func.func @transform_3(%arg0: i32) -> (i32, i32) {
    %c0_i32 = arith.constant 0 : i32
    %c0_i32_0 = arith.constant 0 : i32
    %c0_i32_1 = arith.constant 0 : i32
    return %c0_i32, %c0_i32_0 : i32, i32
  }
  func.func @transform_4(%arg0: i32) -> (i32, i32) {
    %c0_i32 = arith.constant 0 : i32
    %c0_i32_0 = arith.constant 0 : i32
    %c0_i32_1 = arith.constant 0 : i32
    return %c0_i32, %c0_i32_0 : i32, i32
  }
  func.func @transform_5(%arg0: i32) -> (i32, i32) {
    %c0_i32 = arith.constant 0 : i32
    %c0_i32_0 = arith.constant 0 : i32
    return %arg0, %c0_i32 : i32, i32
  }
}

</mosaic_0001>

<llo_original>
// kernel: tpu_custom_call.1
$region0: #{tpu_custom_call.1}
  #allocation0 [shape = 'u32[]', space=smem, size = 0x4, offset = 0x4, fixed_abs, tag = 'smem constant byte address 0x4 - core index']
  #allocation1 [shape = 'u32[144,128]{1,0:T(1,128)}', space=vmem, size = 0x12000, scoped, tag = 'internal scratch']
  %s0 = inlined_call_operand.vmem [shape: f32[8,14], index: 0, kind: input, shape index: {}]
  %s1 = inlined_call_operand.vmem [shape: f32[8,9], index: 1, kind: input, shape index: {}]
  %s2 = inlined_call_operand.vmem [shape: f32[8,1], index: 2, kind: input, shape index: {}]
  %s3 = inlined_call_operand.vmem [shape: f32[88,48], index: 3, kind: input, shape index: {}]
  %s4 = inlined_call_operand.vmem [shape: f32[4,48], index: 4, kind: input, shape index: {}]
  %s5 = inlined_call_operand.hbm [shape: f32[8,48], index: 5, kind: output, shape index: {}]
  %s6 = sld [smem:[#allocation0]]
  $region30: #{tpu_custom_call.1} parent=0
    _
  %s8 = ssub.s32 1, %s6
  %s9 = scalar_select 0, %s8, %s6
  $region1: #{tpu_custom_call.1} parent=0
    #allocation2 [shape = 'u8[4096]{0}', space=vmem, size = 0x1000, scoped, tag = 'output window, operand 0, single buffered']
    #allocation3 [shape = 's32[1]{0}', space=sflag, size = 0x4, scoped, tag = 'scoped memory for tpu_custom_call.1']
    %10 = vsyncpa [#allocation3], 0
    // Predicated region
    $region2: #{tpu_custom_call.1} parent=1 // pred_check
      _
    $region3: #{tpu_custom_call.1} parent=1 // pred_check_branch
      %12 = sbr.rel (0) target = $region5
    $region4: #{tpu_custom_call.1} parent=1 // pred_region
      _
    $region5: #{tpu_custom_call.1} parent=1 // pred_fallthru
      _
    // Predicated region
    $region6: #{tpu_custom_call.1} parent=1 // pred_check
      _
    $region7: #{tpu_custom_call.1} parent=1 // pred_check_branch
      %14 = sbr.rel (0) target = $region9
    $region8: #{tpu_custom_call.1} parent=1 // pred_region
      _
    $region9: #{tpu_custom_call.1} parent=1 // pred_fallthru
      _
    // Predicated region
    $region10: #{tpu_custom_call.1} parent=1 // pred_check
      _
    $region11: #{tpu_custom_call.1} parent=1 // pred_check_branch
      %16 = sbr.rel (0) target = $region13
    $region12: #{tpu_custom_call.1} parent=1 // pred_region
      _
    $region13: #{tpu_custom_call.1} parent=1 // pred_fallthru
      _
    // Predicated region
    $region14: #{tpu_custom_call.1} parent=1 // pred_check
      _
    $region15: #{tpu_custom_call.1} parent=1 // pred_check_branch
      %18 = sbr.rel (0) target = $region17
    $region16: #{tpu_custom_call.1} parent=1 // pred_region
      _
    $region17: #{tpu_custom_call.1} parent=1 // pred_fallthru
      _
    // Predicated region
    $region18: #{tpu_custom_call.1} parent=1 // pred_check
      _
    $region19: #{tpu_custom_call.1} parent=1 // pred_check_branch
      %20 = sbr.rel (0) target = $region21
    $region20: #{tpu_custom_call.1} parent=1 // pred_region
      _
    $region21: #{tpu_custom_call.1} parent=1 // pred_fallthru
      _
    %v21 = vld [vmem:[%s0] sm:$0xff]
    %v22 = vld [vmem:[%s1] sm:$0xff]
    %v23 = vld [vmem:[%s2] sm:$0xff]
    %v24 = vld [vmem:[%s3] sm:$0xff]
    %v25 = vld [vmem:[%s3 + $0x8] sm:$0x3f]
    %v26 = vld [vmem:[%s3 + $0x10] sm:$0xff]
    %v27 = vld [vmem:[%s3 + $0x18] sm:$0x1]
    %v28 = vld [vmem:[%s3 + $0x20] sm:$0x1]
    %v29 = vld [vmem:[%s3 + $0x28] sm:$0xff]
    %v30 = vld [vmem:[%s3 + $0x30] sm:$0xff]
    %v31 = vld [vmem:[%s3 + $0x38] sm:$0xff]
    %v32 = vld [vmem:[%s3 + $0x40] sm:$0xff]
    %v33 = vld [vmem:[%s3 + $0x48] sm:$0xff]
    %v34 = vld [vmem:[%s3 + $0x50] sm:$0xff]
    %v35 = vld [vmem:[%s4] sm:$0x1]
    %v36 = vld [vmem:[%s4 + $0x1] sm:$0x1]
    %v37 = vld [vmem:[%s4 + $0x2] sm:$0x1]
    %v38 = vld [vmem:[%s4 + $0x3] sm:$0x1]
    %vm39 = vcmask 72704
    %v41 = vsel %vm39, %v22, 0
    %vm43 = vcmask 1040384
    %v45 = vsel %vm43, %v27, 0
    %47 = vmatprep.subr.mxu0 0.0
    %48 = vmatpush1.msra.mxu0 %v26
    %49 = vmatprep.subr.mxu0 0.0
    %50 = vmatpush1.msra.mxu0 %v45
    %51 = vmatprep.subr.mxu0 0.0
    %52 = vmatpush1.msra.mxu0 0.0
    %53 = vmatprep.subr.mxu0 0.0
    %54 = vmatpush1.msra.mxu0 0.0
    %55 = vmatprep.subr.mxu0 0.0
    %56 = vmatpush1.msra.mxu0 0.0
    %57 = vmatprep.subr.mxu0 0.0
    %58 = vmatpush1.msra.mxu0 0.0
    %59 = vmatprep.subr.mxu0 0.0
    %60 = vmatpush1.msra.mxu0 0.0
    %61 = vmatprep.subr.mxu0 0.0
    %62 = vmatpush1.msra.mxu0 0.0
    %63 = vmatprep.subr.mxu0 0.0
    %64 = vmatpush1.msra.mxu0 0.0
    %65 = vmatprep.subr.mxu0 0.0
    %66 = vmatpush1.msra.mxu0 0.0
    %67 = vmatprep.subr.mxu0 0.0
    %68 = vmatpush1.msra.mxu0 0.0
    %69 = vmatprep.subr.mxu0 0.0
    %70 = vmatpush1.msra.mxu0 0.0
    %71 = vmatprep.subr.mxu0 0.0
    %72 = vmatpush1.msra.mxu0 0.0
    %73 = vmatprep.subr.mxu0 0.0
    %74 = vmatpush1.msra.mxu0 0.0
    %75 = vmatprep.subr.mxu0 0.0
    %76 = vmatpush1.msra.mxu0 0.0
    %77 = vmatprep.subr.mxu0 0.0
    %78 = vmatpush1.msra.mxu0 0.0
    %79 = vmatprep.subr.mxu0 0.0
    %80 = vmatpush1.msra.mxu0 0.0
    %81 = vmatprep.subr.mxu0 0.0
    %82 = vmatpush1.msra.mxu0 0.0
    %83 = vmatprep.subr.mxu0 0.0
    %84 = vmatpush1.msra.mxu0 0.0
    %85 = vmatprep.subr.mxu0 0.0
    %86 = vmatpush1.msra.mxu0 0.0
    %87 = vmatprep.subr.mxu0 0.0
    %88 = vmatpush1.msra.mxu0 0.0
    %89 = vmatprep.subr.mxu0 0.0
    %90 = vmatpush1.msra.mxu0 0.0
    %91 = vmatprep.subr.mxu0 0.0
    %92 = vmatpush1.msra.mxu0 0.0
    %93 = vmatprep.subr.mxu0 0.0
    %94 = vmatpush1.msra.mxu0 0.0
    %95 = vmatprep.subr.mxu0 0.0
    %96 = vmatpush1.msra.mxu0 0.0
    %97 = vmatprep.subr.mxu0 0.0
    %98 = vmatpush1.msra.mxu0 0.0
    %99 = vmatprep.subr.mxu0 0.0
    %100 = vmatpush1.msra.mxu0 0.0
    %101 = vmatprep.subr.mxu0 0.0
    %102 = vmatpush1.msra.mxu0 0.0
    %103 = vmatprep.subr.mxu0 0.0
    %104 = vmatpush1.msra.mxu0 0.0
    %105 = vmatprep.subr.mxu0 0.0
    %106 = vmatpush1.msra.mxu0 0.0
    %107 = vmatprep.subr.mxu0 0.0
    %108 = vmatpush1.msra.mxu0 0.0
    %109 = vmatprep.subr.mxu0 0.0
    %110 = vmatpush1.msra.mxu0 0.0
    %111 = vmatprep.mubr.f32.mxu0 0.0
    %112 = vmatmul.mubr.f32.gmra.mrb[0].mxu0 %v41
    %v113 = vpop.f32.mrb[0].mxu0
    %v114 = vadd.f32 0.0, %v113
    %v115 = vpop.f32.mrb[0].mxu0
    %116 = vdwg.mxu0
    %vm117 = vcmask 113664
    %v119 = vsel %vm117, %v21, 0
    %vm121 = vcmask 1045504
    %v123 = vsel %vm121, %v25, 0
    %125 = vmatprep.subr.mxu0 0.0
    %126 = vmatpush1.msra.mxu0 %v24
    %127 = vmatprep.subr.mxu0 0.0
    %128 = vmatpush1.msra.mxu0 %v123
    %129 = vmatprep.subr.mxu0 0.0
    %130 = vmatpush1.msra.mxu0 0.0
    %131 = vmatprep.subr.mxu0 0.0
    %132 = vmatpush1.msra.mxu0 0.0
    %133 = vmatprep.subr.mxu0 0.0
    %134 = vmatpush1.msra.mxu0 0.0
    %135 = vmatprep.subr.mxu0 0.0
    %136 = vmatpush1.msra.mxu0 0.0
    %137 = vmatprep.subr.mxu0 0.0
    %138 = vmatpush1.msra.mxu0 0.0
    %139 = vmatprep.subr.mxu0 0.0
    %140 = vmatpush1.msra.mxu0 0.0
    %141 = vmatprep.subr.mxu0 0.0
    %142 = vmatpush1.msra.mxu0 0.0
    %143 = vmatprep.subr.mxu0 0.0
    %144 = vmatpush1.msra.mxu0 0.0
    %145 = vmatprep.subr.mxu0 0.0
    %146 = vmatpush1.msra.mxu0 0.0
    %147 = vmatprep.subr.mxu0 0.0
    %148 = vmatpush1.msra.mxu0 0.0
    %149 = vmatprep.subr.mxu0 0.0
    %150 = vmatpush1.msra.mxu0 0.0
    %151 = vmatprep.subr.mxu0 0.0
    %152 = vmatpush1.msra.mxu0 0.0
    %153 = vmatprep.subr.mxu0 0.0
    %154 = vmatpush1.msra.mxu0 0.0
    %155 = vmatprep.subr.mxu0 0.0
    %156 = vmatpush1.msra.mxu0 0.0
    %157 = vmatprep.subr.mxu0 0.0
    %158 = vmatpush1.msra.mxu0 0.0
    %159 = vmatprep.subr.mxu0 0.0
    %160 = vmatpush1.msra.mxu0 0.0
    %161 = vmatprep.subr.mxu0 0.0
    %162 = vmatpush1.msra.mxu0 0.0
    %163 = vmatprep.subr.mxu0 0.0
    %164 = vmatpush1.msra.mxu0 0.0
    %165 = vmatprep.subr.mxu0 0.0
    %166 = vmatpush1.msra.mxu0 0.0
    %167 = vmatprep.subr.mxu0 0.0
    %168 = vmatpush1.msra.mxu0 0.0
    %169 = vmatprep.subr.mxu0 0.0
    %170 = vmatpush1.msra.mxu0 0.0
    %171 = vmatprep.subr.mxu0 0.0
    %172 = vmatpush1.msra.mxu0 0.0
    %173 = vmatprep.subr.mxu0 0.0
    %174 = vmatpush1.msra.mxu0 0.0
    %175 = vmatprep.subr.mxu0 0.0
    %176 = vmatpush1.msra.mxu0 0.0
    %177 = vmatprep.subr.mxu0 0.0
    %178 = vmatpush1.msra.mxu0 0.0
    %179 = vmatprep.subr.mxu0 0.0
    %180 = vmatpush1.msra.mxu0 0.0
    %181 = vmatprep.subr.mxu0 0.0
    %182 = vmatpush1.msra.mxu0 0.0
    %183 = vmatprep.subr.mxu0 0.0
    %184 = vmatpush1.msra.mxu0 0.0
    %185 = vmatprep.subr.mxu0 0.0
    %186 = vmatpush1.msra.mxu0 0.0
    %187 = vmatprep.subr.mxu0 0.0
    %188 = vmatpush1.msra.mxu0 0.0
    %189 = vmatprep.mubr.f32.mxu0 0.0
    %190 = vmatmul.mubr.f32.gmra.mrb[0].mxu0 %v119
    %v191 = vpop.f32.mrb[0].mxu0
    %v192 = vadd.f32 %v114, %v191
    %v193 = vpop.f32.mrb[0].mxu0
    %194 = vdwg.mxu0
    %196 = vset.pattern.permute.xlu0 0
    %197 = vperm.xlu0 %196, %v23
    %v198 = vpop.permute.xlu0 %197
    %v200 = vlaneseq
    %v201 = vshrl.u32 %v200, 7
    %v202 = vsub.s32 0, %v201
    %v203 = vrot.slane %v28, %v202
    %v204 = vmul.f32 %v198, %v203
    %v205 = vadd.f32 %v192, %v204
    %v206 = vlaneseq
    %v207 = vshrl.u32 %v206, 7
    %v208 = vsub.s32 0, %v207
    %v209 = vrot.slane %v35, %v208
    %v210 = vadd.f32 %v205, %v209
    %v211 = vmax.f32 %v210, 0.0
    %v212 = vlaneseq
    %v213 = vshrl.u32 %v212, 7
    %v214 = vsub.s32 0, %v213
    %v215 = vrot.slane %v36, %v214
    %vm216 = vcmask 392192
    %v218 = vsel %vm216, %v211, 0
    %220 = vmatprep.subr.mxu0 0.0
    %221 = vmatpush1.msra.mxu0 %v29
    %222 = vmatprep.subr.mxu0 0.0
    %223 = vmatpush1.msra.mxu0 %v30
    %224 = vmatprep.subr.mxu0 0.0
    %225 = vmatpush1.msra.mxu0 %v31
    %226 = vmatprep.subr.mxu0 0.0
    %227 = vmatpush1.msra.mxu0 %v32
    %228 = vmatprep.subr.mxu0 0.0
    %229 = vmatpush1.msra.mxu0 %v33
    %230 = vmatprep.subr.mxu0 0.0
    %231 = vmatpush1.msra.mxu0 %v34
    %232 = vmatprep.subr.mxu0 0.0
    %233 = vmatpush1.msra.mxu0 0.0
    %234 = vmatprep.subr.mxu0 0.0
    %235 = vmatpush1.msra.mxu0 0.0
    %236 = vmatprep.subr.mxu0 0.0
    %237 = vmatpush1.msra.mxu0 0.0
    %238 = vmatprep.subr.mxu0 0.0
    %239 = vmatpush1.msra.mxu0 0.0
    %240 = vmatprep.subr.mxu0 0.0
    %241 = vmatpush1.msra.mxu0 0.0
    %242 = vmatprep.subr.mxu0 0.0
    %243 = vmatpush1.msra.mxu0 0.0
    %244 = vmatprep.subr.mxu0 0.0
    %245 = vmatpush1.msra.mxu0 0.0
    %246 = vmatprep.subr.mxu0 0.0
    %247 = vmatpush1.msra.mxu0 0.0
    %248 = vmatprep.subr.mxu0 0.0
    %249 = vmatpush1.msra.mxu0 0.0
    %250 = vmatprep.subr.mxu0 0.0
    %251 = vmatpush1.msra.mxu0 0.0
    %252 = vmatprep.subr.mxu0 0.0
    %253 = vmatpush1.msra.mxu0 0.0
    %254 = vmatprep.subr.mxu0 0.0
    %255 = vmatpush1.msra.mxu0 0.0
    %256 = vmatprep.subr.mxu0 0.0
    %257 = vmatpush1.msra.mxu0 0.0
    %258 = vmatprep.subr.mxu0 0.0
    %259 = vmatpush1.msra.mxu0 0.0
    %260 = vmatprep.subr.mxu0 0.0
    %261 = vmatpush1.msra.mxu0 0.0
    %262 = vmatprep.subr.mxu0 0.0
    %263 = vmatpush1.msra.mxu0 0.0
    %264 = vmatprep.subr.mxu0 0.0
    %265 = vmatpush1.msra.mxu0 0.0
    %266 = vmatprep.subr.mxu0 0.0
    %267 = vmatpush1.msra.mxu0 0.0
    %268 = vmatprep.subr.mxu0 0.0
    %269 = vmatpush1.msra.mxu0 0.0
    %270 = vmatprep.subr.mxu0 0.0
    %271 = vmatpush1.msra.mxu0 0.0
    %272 = vmatprep.subr.mxu0 0.0
    %273 = vmatpush1.msra.mxu0 0.0
    %274 = vmatprep.subr.mxu0 0.0
    %275 = vmatpush1.msra.mxu0 0.0
    %276 = vmatprep.subr.mxu0 0.0
    %277 = vmatpush1.msra.mxu0 0.0
    %278 = vmatprep.subr.mxu0 0.0
    %279 = vmatpush1.msra.mxu0 0.0
    %280 = vmatprep.subr.mxu0 0.0
    %281 = vmatpush1.msra.mxu0 0.0
    %282 = vmatprep.subr.mxu0 0.0
    %283 = vmatpush1.msra.mxu0 0.0
    %284 = vmatprep.mubr.f32.mxu0 0.0
    %285 = vmatmul.mubr.f32.gmra.mrb[0].mxu0 %v218
    %v286 = vpop.f32.mrb[0].mxu0
    %v287 = vadd.f32 %v215, %v286
    %v288 = vpop.f32.mrb[0].mxu0
    %289 = vdwg.mxu0
    %v290 = vlaneseq
    %v291 = vand.u32 %v290, 127
    %vm292 = vcmp.lt.s32.totalorder %v291, 28
    %vm293 = vcmp.ge.s32.totalorder %v291, 28
    %vm294 = vcmp.lt.s32.totalorder %v291, 46
    %vm295 = vmand %vm293, %vm294
    %vm296 = vcmp.ge.s32.totalorder %v291, 46
    %v297 = vsel %vm292, 1, 0
    %vm298 = vcmp.eq.s32.totalorder %v297, 1
    %v299 = vsel %vm298, %v287, 0.0
    %v300 = vsel %vm216, %v299, 0.0
    %301 = vadd.xlane.f32.xlu0 %v300
    %v302 = vpop.xlane.xlu0 %301
    %v303 = vmul.f32 %v302, 0.035714287
    %v304 = vsel %vm295, 1, 0
    %vm305 = vcmp.eq.s32.totalorder %v304, 1
    %v306 = vsel %vm305, %v287, 0.0
    %v307 = vsel %vm216, %v306, 0.0
    %308 = vadd.xlane.f32.xlu0 %v307
    %v309 = vpop.xlane.xlu0 %308
    %v310 = vmul.f32 %v309, 0.055555556
    %v311 = vsel %vm296, 1, 0
    %vm312 = vcmp.eq.s32.totalorder %v311, 1
    %v313 = vsel %vm312, %v287, 0.0
    %v314 = vsel %vm216, %v313, 0.0
    %315 = vadd.xlane.f32.xlu0 %v314
    %v316 = vpop.xlane.xlu0 %315
    %v317 = vmul.f32 %v316, 0.5
    %v318 = vsel %vm305, %v310, %v317
    %v319 = vsel %vm298, %v303, %v318
    %v320 = vsub.f32 %v287, %v319
    %v321 = vmul.f32 %v320, %v320
    %v322 = vsel %vm298, %v321, 0.0
    %v323 = vsel %vm216, %v322, 0.0
    %324 = vadd.xlane.f32.xlu0 %v323
    %v325 = vpop.xlane.xlu0 %324
    %v326 = vmul.f32 %v325, 0.035714287
    %v327 = vadd.f32 %v326, 1e-05
    %v328 = vrsqrt.pop %v327
    %v329 = vsel %vm305, %v321, 0.0
    %v330 = vsel %vm216, %v329, 0.0
    %331 = vadd.xlane.f32.xlu0 %v330
    %v332 = vpop.xlane.xlu0 %331
    %v333 = vmul.f32 %v332, 0.055555556
    %v334 = vadd.f32 %v333, 1e-05
    %v335 = vrsqrt.pop %v334
    %v336 = vsel %vm312, %v321, 0.0
    %v337 = vsel %vm216, %v336, 0.0
    %338 = vadd.xlane.f32.xlu0 %v337
    %v339 = vpop.xlane.xlu0 %338
    %v340 = vmul.f32 %v339, 0.5
    %v341 = vadd.f32 %v340, 1e-05
    %v342 = vrsqrt.pop %v341
    %v343 = vsel %vm305, %v335, %v342
    %v344 = vsel %vm298, %v328, %v343
    %v345 = vmul.f32 %v320, %v344
    %v346 = vlaneseq
    %v347 = vshrl.u32 %v346, 7
    %v348 = vsub.s32 0, %v347
    %v349 = vrot.slane %v37, %v348
    %v350 = vmul.f32 %v345, %v349
    %v351 = vlaneseq
    %v352 = vshrl.u32 %v351, 7
    %v353 = vsub.s32 0, %v352
    %v354 = vrot.slane %v38, %v353
    %v355 = vadd.f32 %v350, %v354
    %356 = vst.msk [vmem:[#allocation2] sm:$0xff] %vm216, %v355
    // Predicated region
    $region22: #{tpu_custom_call.1} parent=1 // pred_check
      _
    $region23: #{tpu_custom_call.1} parent=1 // pred_check_branch
      %358 = sbr.rel (0) target = $region25
    $region24: #{tpu_custom_call.1} parent=1 // pred_region
      %s360 = ssub.s32 128, 128
      %361 = vsyncadd [#allocation3], %s360
      %s363 = sshll.u32 [#allocation2], 4
      %s364 = int_to_ptr.vmem [resolvable:$true] %s363
      %366 = dma.vmem_to_hbm [thread:$0]  %s364, 128, %s5, [#allocation3]
    $region25: #{tpu_custom_call.1} parent=1 // pred_fallthru
      _
    // Predicated region
    $region26: #{tpu_custom_call.1} parent=1 // pred_check
      _
    $region27: #{tpu_custom_call.1} parent=1 // pred_check_branch
      %368 = sbr.rel (0) target = $region29
    $region28: #{tpu_custom_call.1} parent=1 // pred_region
      %369 = dma.done [#allocation3], 128
    $region29: #{tpu_custom_call.1} parent=1 // pred_fallthru
      _
    %370 = vsyncpa [#allocation3], 1

</llo_original>
